<compile_context>
chip_gen: v5e
topology: v5e:2x2
jax: 0.10.0
libtpu: 0.0.40
codegen_flags: <defaults>
</compile_context>

<pallas_src>
import math

import jax
import jax.numpy as jnp
from jax.experimental import pallas as pl
from jax.experimental.pallas import tpu as pltpu

LANE = 128


def _round_up(x, m):
    return ((x + m - 1) // m) * m


# ---------------------------------------------------------------------------
# Stage 1: support = X @ W  (fin-tiled, f32 accumulation, computed once)
# ---------------------------------------------------------------------------
def _support_kernel(x_ref, w_ref, s_ref, acc_ref):
    kf = pl.program_id(1)

    @pl.when(kf == 0)
    def _init():
        acc_ref[...] = jnp.zeros_like(acc_ref)

    acc_ref[...] += jnp.dot(x_ref[...], w_ref[...],
                            preferred_element_type=jnp.float32)

    @pl.when(kf == pl.num_programs(1) - 1)
    def _finalize():
        s_ref[...] = acc_ref[...].astype(s_ref.dtype)


# ---------------------------------------------------------------------------
# Stage 2: out = adj @ support (+ bias), K-tiled.
# The f32 output block is the accumulator (resident across the K axis).
# ---------------------------------------------------------------------------
def _make_aggregate_kernel(tile_k, support_resident, has_bias):
    def kernel(*refs):
        if has_bias:
            adj_ref, s_ref, b_ref, out_ref = refs
        else:
            adj_ref, s_ref, out_ref = refs

        k = pl.program_id(1)

        @pl.when(k == 0)
        def _init():
            if has_bias:
                # Fold bias into the accumulator init (added exactly once).
                out_ref[...] = jnp.broadcast_to(
                    b_ref[...].astype(jnp.float32), out_ref.shape)
            else:
                out_ref[...] = jnp.zeros_like(out_ref)

        if support_resident:
            # Support is held fully resident in VMEM; slice the K block.
            k0 = pl.multiple_of(k * tile_k, tile_k)
            s_blk = s_ref[pl.ds(k0, tile_k), :]
        else:
            s_blk = s_ref[...]

        out_ref[...] += jnp.dot(adj_ref[...], s_blk,
                                preferred_element_type=jnp.float32)

    return kernel


def graph_convolution(x, adj, weight, bias=None, *,
                      tile_m=None, tile_k=None,
                      compute_dtype=jnp.bfloat16):
    """GCN forward. x:[N,Fin], adj:[N,N], weight:[Fin,Fout], bias:[Fout]|None."""
    n, fin = x.shape
    fin_w, fout = weight.shape
    assert fin_w == fin
    assert adj.shape == (n, n)

    out_dtype = x.dtype

    # Lane-dense output columns (unmasked vst, full MXU result columns).
    fout_pad = _round_up(fout, LANE)

    # ---- node-dimension tiling ----------------------------------------------
    n_lane = _round_up(n, LANE)
    if n_lane <= 1024:
        # Small graph: single K step; split M when possible so the "parallel"
        # M axis has >= 2 steps (megacore / v7x 2-TC sharding).
        tk_def = n_lane
        tm_def = n_lane // 2 if n_lane % 256 == 0 else n_lane
    else:
        # Large graph: 512-granular tiles (~85% of HBM roofline vs ~63% at
        # 256).  Per-step VMEM (bf16 adj 512x512 x2 bufs + support + f32 out)
        # stays well under v5e's 16 MiB scoped default.
        tm_def, tk_def = 512, 512
    tile_m = tile_m or tm_def
    tile_k = tile_k or tk_def
    # Pad N up to a multiple of the chosen tiles rather than shrinking tiles
    # for awkward node counts; zero padding is exact for this op.
    n_pad = _round_up(n, math.lcm(tile_m, tile_k))

    # ---- input-feature tiling (bounds stage-1 VMEM independent of fin) ------
    FIN_TILE = 2048
    if fin <= FIN_TILE:
        tile_fin, fin_pad = fin, fin
    else:
        tile_fin = FIN_TILE
        fin_pad = _round_up(fin, FIN_TILE)

    # ---- cast + pad (exact: padded rows/cols are zero and sliced off) -------
    # TODO(synk): for multi-layer GCNs, cast/pad adj once outside and reuse to
    # avoid repeating this N^2 HBM pass for every layer.
    xp = x.astype(compute_dtype)
    adjp = adj.astype(compute_dtype)
    wp = weight.astype(compute_dtype)
    if n_pad != n or fin_pad != fin:
        xp = jnp.pad(xp, ((0, n_pad - n), (0, fin_pad - fin)))
    if n_pad != n:
        adjp = jnp.pad(adjp, ((0, n_pad - n), (0, n_pad - n)))
    if fin_pad != fin or fout_pad != fout:
        wp = jnp.pad(wp, ((0, fin_pad - fin), (0, fout_pad - fout)))

    # ---- stage 1: support = X @ W, computed exactly once ---------------------
    support = pl.pallas_call(
        _support_kernel,
        out_shape=jax.ShapeDtypeStruct((n_pad, fout_pad), compute_dtype),
        grid_spec=pltpu.PrefetchScalarGridSpec(
            num_scalar_prefetch=0,
            grid=(n_pad // tile_m, fin_pad // tile_fin),
            in_specs=[
                pl.BlockSpec((tile_m, tile_fin), lambda i, kf: (i, kf)),
                pl.BlockSpec((tile_fin, fout_pad), lambda i, kf: (kf, 0)),
            ],
            out_specs=pl.BlockSpec((tile_m, fout_pad), lambda i, kf: (i, 0)),
            scratch_shapes=[pltpu.VMEM((tile_m, fout_pad), jnp.float32)]),
        compiler_params=pltpu.CompilerParams(
            dimension_semantics=("parallel", "arbitrary")),
    )(xp, wp)

    # ---- stage 2: out = adj @ support (+ bias), K-tiled -----------------------
    nm, nk = n_pad // tile_m, n_pad // tile_k
    # Keep support fully VMEM-resident (DMA'd once) when it is small, so it
    # is not re-streamed for every M tile.
    sup_bytes = n_pad * fout_pad * jnp.dtype(compute_dtype).itemsize
    support_resident = (nk > 1) and (sup_bytes <= 4 * 1024 * 1024)

    adj_spec = pl.BlockSpec((tile_m, tile_k), lambda i, k: (i, k))
    if support_resident:
        sup_spec = pl.BlockSpec((n_pad, fout_pad), lambda i, k: (0, 0))
    else:
        sup_spec = pl.BlockSpec((tile_k, fout_pad), lambda i, k: (k, 0))
    out_spec = pl.BlockSpec((tile_m, fout_pad), lambda i, k: (i, 0))

    has_bias = bias is not None
    kernel = _make_aggregate_kernel(tile_k, support_resident, has_bias)

    in_arrays = [adjp, support]
    in_specs = [adj_spec, sup_spec]
    if has_bias:
        bias_p = bias.astype(jnp.float32).reshape(1, fout)
        if fout_pad != fout:
            bias_p = jnp.pad(bias_p, ((0, 0), (0, fout_pad - fout)))
        in_arrays.append(bias_p)
        in_specs.append(pl.BlockSpec((1, fout_pad), lambda i, k: (0, 0)))

    out = pl.pallas_call(
        kernel,
        # f32 output doubles as the cross-K accumulator (its block is resident
        # across the "arbitrary" K axis) -> no scratch, no finalize copy.
        out_shape=jax.ShapeDtypeStruct((n_pad, fout_pad), jnp.float32),
        grid_spec=pltpu.PrefetchScalarGridSpec(
            num_scalar_prefetch=0,
            grid=(nm, nk),
            in_specs=in_specs,
            out_specs=out_spec),
        compiler_params=pltpu.CompilerParams(
            dimension_semantics=("parallel", "arbitrary")),
    )(*in_arrays)

    if n_pad != n or fout_pad != fout:
        out = out[:n, :fout]
    if out_dtype != jnp.float32:
        out = out.astype(out_dtype)
    return out


if __name__ == "__main__":
    # Small, TPU-friendly shapes consistent with the module:
    #   N nodes = 256, in_features = 64, out_features = 128
    N, IN_F, OUT_F = 256, 64, 128
    key = jax.random.PRNGKey(0)
    k_x, k_adj, k_w, k_b = jax.random.split(key, 4)

    # Deterministic parameter init mirroring reset_parameters():
    #   uniform(-stdv, stdv), stdv = 1/sqrt(out_features)
    stdv = 1.0 / math.sqrt(OUT_F)
    weight = jax.random.uniform(k_w, (IN_F, OUT_F), jnp.float32, -stdv, stdv)
    bias = jax.random.uniform(k_b, (OUT_F,), jnp.float32, -stdv, stdv)

    x = jax.random.normal(k_x, (N, IN_F), jnp.float32)
    # Row-normalized random dense adjacency, like a typical GCN normalized adj.
    adj_raw = jax.random.uniform(k_adj, (N, N), jnp.float32)
    adj = adj_raw / jnp.sum(adj_raw, axis=1, keepdims=True)

    ref = adj @ (x @ weight) + bias
    ref_nb = adj @ (x @ weight)

    # Default path: bf16 compute (bandwidth-optimal), f32 accumulation.
    out = jax.block_until_ready(graph_convolution(x, adj, weight, bias))
    assert out.shape == (N, OUT_F)
    assert jnp.allclose(out, ref, atol=1e-2, rtol=1e-2), "mismatch (bf16, bias)"

    out_nb = jax.block_until_ready(graph_convolution(x, adj, weight, None))
    assert jnp.allclose(out_nb, ref_nb, atol=1e-2, rtol=1e-2), "mismatch (bf16, no bias)"

    # Full-f32 path for a tight numerical check of the kernel structure.
    out_f32 = jax.block_until_ready(
        graph_convolution(x, adj, weight, bias, compute_dtype=jnp.float32))
    assert jnp.allclose(out_f32, ref, atol=1e-4, rtol=1e-4), "mismatch (f32, bias)"

    out_f32_nb = jax.block_until_ready(
        graph_convolution(x, adj, weight, None, compute_dtype=jnp.float32))
    assert jnp.allclose(out_f32_nb, ref_nb, atol=1e-4, rtol=1e-4), "mismatch (f32, no bias)"

    print("KERNEL_OK")
</pallas_src>

<mosaic_0001>
module attributes {stable_mosaic.version = 11 : i64} {
  func.func @_support_kernel(%arg0: i32, %arg1: i32, %arg2: memref<128x64xbf16, #tpu.memory_space<vmem>>, %arg3: memref<64x128xbf16, #tpu.memory_space<vmem>>, %arg4: memref<128x128xbf16, #tpu.memory_space<vmem>>, %arg5: memref<128x128xf32, #tpu.memory_space<vmem>>) attributes {dimension_semantics = [#tpu.dimension_semantics<parallel>, #tpu.dimension_semantics<arbitrary>], iteration_bounds = array<i64: 2, 1>, scalar_prefetch = 0 : i64, scratch_operands = 1 : i64, tpu.core_type = #tpu.core_type<tc>, window_params = [{transform_indices = @transform_0, window_bounds = array<i64: 128, 64>}, {transform_indices = @transform_1, window_bounds = array<i64: 64, 128>}, {transform_indices = @transform_2, window_bounds = array<i64: 128, 128>}]} {
    %c0_i32 = arith.constant 0 : i32
    %0 = arith.cmpi eq, %arg1, %c0_i32 : i32
    %1 = arith.extui %0 : i1 to i32
    %c0_i32_0 = arith.constant 0 : i32
    %2 = arith.cmpi ne, %1, %c0_i32_0 : i32
    scf.if %2 {
      %cst_10 = arith.constant 0.000000e+00 : f32
      %12 = vector.broadcast %cst_10 : f32 to vector<128x128xf32>
      %c0_11 = arith.constant 0 : index
      %c0_12 = arith.constant 0 : index
      %13 = vector.load %arg5[%c0_11, %c0_12] : memref<128x128xf32, #tpu.memory_space<vmem>>, vector<128x128xf32>
      tpu.vector_store %arg5[%c0_11, %c0_12], %12 {strides = array<i32>} : memref<128x128xf32, #tpu.memory_space<vmem>>, vector<128x128xf32>,
    } else {
    }
    %c0 = arith.constant 0 : index
    %c0_1 = arith.constant 0 : index
    %3 = vector.load %arg5[%c0, %c0_1] : memref<128x128xf32, #tpu.memory_space<vmem>>, vector<128x128xf32>
    %c0_2 = arith.constant 0 : index
    %c0_3 = arith.constant 0 : index
    %4 = vector.load %arg2[%c0_2, %c0_3] : memref<128x64xbf16, #tpu.memory_space<vmem>>, vector<128x64xbf16>
    %c0_4 = arith.constant 0 : index
    %c0_5 = arith.constant 0 : index
    %5 = vector.load %arg3[%c0_4, %c0_5] : memref<64x128xbf16, #tpu.memory_space<vmem>>, vector<64x128xbf16>
    %cst = arith.constant dense<0.000000e+00> : vector<128x128xf32>
    %6 = tpu.matmul %4, %5, %cst {dimension_numbers = #tpu.dot_dimension_numbers<[1], [0], [0], [1], [0, 0, 1, 1], [], []>} : vector<128x64xbf16>, vector<64x128xbf16>, vector<128x128xf32> -> vector<128x128xf32>
    %7 = arith.addf %3, %6 : vector<128x128xf32>
    %c0_6 = arith.constant 0 : index
    %c0_7 = arith.constant 0 : index
    %8 = vector.load %arg5[%c0_6, %c0_7] : memref<128x128xf32, #tpu.memory_space<vmem>>, vector<128x128xf32>
    tpu.vector_store %arg5[%c0_6, %c0_7], %7 {strides = array<i32>} : memref<128x128xf32, #tpu.memory_space<vmem>>, vector<128x128xf32>,
    %c0_i32_8 = arith.constant 0 : i32
    %9 = arith.cmpi eq, %arg1, %c0_i32_8 : i32
    %10 = arith.extui %9 : i1 to i32
    %c0_i32_9 = arith.constant 0 : i32
    %11 = arith.cmpi ne, %10, %c0_i32_9 : i32
    scf.if %11 {
      %c0_10 = arith.constant 0 : index
      %c0_11 = arith.constant 0 : index
      %12 = vector.load %arg5[%c0_10, %c0_11] : memref<128x128xf32, #tpu.memory_space<vmem>>, vector<128x128xf32>
      %13 = arith.truncf %12 : vector<128x128xf32> to vector<128x128xbf16>
      %c0_12 = arith.constant 0 : index
      %c0_13 = arith.constant 0 : index
      %14 = vector.load %arg4[%c0_12, %c0_13] : memref<128x128xbf16, #tpu.memory_space<vmem>>, vector<128x128xbf16>
      tpu.vector_store %arg4[%c0_12, %c0_13], %13 {strides = array<i32>} : memref<128x128xbf16, #tpu.memory_space<vmem>>, vector<128x128xbf16>,
    } else {
    }
    return
  }
  func.func @transform_0(%arg0: i32, %arg1: i32) -> (i32, i32) {
    %c0_i32 = arith.constant 0 : i32
    return %arg0, %arg1 : i32, i32
  }
  func.func @transform_1(%arg0: i32, %arg1: i32) -> (i32, i32) {
    %c0_i32 = arith.constant 0 : i32
    %c0_i32_0 = arith.constant 0 : i32
    return %arg1, %c0_i32 : i32, i32
  }
  func.func @transform_2(%arg0: i32, %arg1: i32) -> (i32, i32) {
    %c0_i32 = arith.constant 0 : i32
    %c0_i32_0 = arith.constant 0 : i32
    return %arg0, %c0_i32 : i32, i32
  }
}

</mosaic_0001>

<llo_original>
// kernel: tpu_custom_call.1
$region0: #{tpu_custom_call.1}
  #allocation0 [shape = 'u32[]', space=smem, size = 0x4, offset = 0x4, fixed_abs, tag = 'smem constant byte address 0x4 - core index']
  #allocation1 [shape = 'u32[72,128]{1,0:T(1,128)}', space=vmem, size = 0x9000, scoped, tag = 'internal scratch']
  #allocation2 [shape = 'f32[128,128]{1,0:T(8,128)}', space=vmem, size = 0x10000, scoped, tag = 'scratch operand']
  %s0 = inlined_call_operand.vmem [shape: bf16[256,64], index: 0, kind: input, shape index: {}]
  %s1 = inlined_call_operand.vmem [shape: bf16[64,128], index: 1, kind: input, shape index: {}]
  %s2 = inlined_call_operand.hbm [shape: bf16[256,128], index: 2, kind: output, shape index: {}]
  %s3 = sld [smem:[#allocation0]]
  $region49: #{tpu_custom_call.1} parent=0
    _
  %s5 = ssub.s32 1, %s3
  %s6 = scalar_select 0, %s5, %s3
  $region1: #{tpu_custom_call.1} parent=0
    #allocation3 [shape = 'u8[65536]{0}', space=vmem, size = 0x10000, scoped, tag = 'output window, operand 0']
    #allocation4 [shape = 's32[2]{0}', space=sflag, size = 0x8, scoped, tag = 'scoped memory for tpu_custom_call.1']
    %7 = vsyncpa [#allocation4], 0
    %s8 = scalar_lea.sflag [#allocation4], 1
    %9 = vsyncpa %s8, 0
    loop: start=0, step=1, limit=4
    $region2: #{tpu_custom_call.1} parent=1 // loop_pre_header
      _
    $region3: #{tpu_custom_call.1} parent=1 // loop_header
      %s11 = sphi 0, %s15
      %p12 = scmp.ge.s32.totalorder %s11, 4
      %s18 = sphi 0, %s30
      %s19 = sphi 0, %s26
      %s20 = sphi 0, %s18
      %s21 = sphi 0, %s19
      %s22 = sphi 0, %s20
      %s23 = sphi 0, %s21
      %s35 = sphi 0, %s37
      %s38 = sphi 0, %s35
      %s39 = sphi 0, %s38
      %s55 = sphi 0, %s39
      %s61 = sphi 0, %s63
      %s64 = sphi 0, %s61
      %s65 = sphi 0, %s64
      %s81 = sphi 0, %s65
      %s87 = sphi 0, %s89
      %s90 = sphi 0, %s87
      %s91 = sphi 0, %s90
      %s107 = sphi 0, %s91
    $region4: #{tpu_custom_call.1} parent=1 // loop_header_branch
      %14 = sbr.rel (%p12) target = $region8
    $region5: #{tpu_custom_call.1} parent=1 // loop_body
      %s16 = ssub.s32 %s11, 1
      %s17 = ssub.s32 %s11, 2
      %s24 = sadd.s32 1, %s19
      %p25 = scmp.ge.s32.totalorder %s24, 1
      %s26 = scalar_select %p25, 0, %s24
      %s27 = sadd.s32 1, %s18
      %s28 = scalar_select %p25, %s27, %s18
      %p29 = scmp.ge.s32.totalorder %s28, 2
      %s30 = scalar_select %p29, 0, %s28
      %s31 = ssub.s32 %s18, %s30
      %s32 = ssub.s32 %s19, %s26
      %s33 = sor.u32 %s31, %s32
      %p34 = scmp.eq.s32.totalorder %s33, 0
      %s36 = sadd.s32 %s35, 1
      %s37 = scalar_select %p34, %s35, %s36
      %p40 = pneg %p34
      %p41 = scmp.eq.s32.totalorder %s11, 1
      %p42 = por %p40, %p41
      %p43 = scmp.ne.s32.totalorder %s35, %s38
      %p44 = scmp.eq.s32.totalorder %s11, 0
      %p45 = por %p43, %p44
      %p46 = scmp.ne.s32.totalorder %s35, %s38
      %p47 = scmp.eq.s32.totalorder %s16, 1
      %p48 = por %p46, %p47
      %p49 = scmp.ne.s32.totalorder %s38, %s39
      %p50 = scmp.eq.s32.totalorder %s16, 0
      %p51 = por %p49, %p50
      %p52 = scmp.ne.s32.totalorder %s38, %s39
      %p53 = scmp.eq.s32.totalorder %s17, 1
      %p54 = por %p52, %p53
      %p56 = scmp.ne.s32.totalorder %s39, %s55
      %p57 = scmp.eq.s32.totalorder %s17, 0
      %p58 = por %p56, %p57
      %s59 = ssub.s32 %s19, %s26
      %p60 = scmp.eq.s32.totalorder %s59, 0
      %s62 = sadd.s32 %s61, 1
      %s63 = scalar_select %p60, %s61, %s62
      %p66 = pneg %p60
      %p67 = scmp.eq.s32.totalorder %s11, 1
      %p68 = por %p66, %p67
      %p69 = scmp.ne.s32.totalorder %s61, %s64
      %p70 = scmp.eq.s32.totalorder %s11, 0
      %p71 = por %p69, %p70
      %p72 = scmp.ne.s32.totalorder %s61, %s64
      %p73 = scmp.eq.s32.totalorder %s16, 1
      %p74 = por %p72, %p73
      %p75 = scmp.ne.s32.totalorder %s64, %s65
      %p76 = scmp.eq.s32.totalorder %s16, 0
      %p77 = por %p75, %p76
      %p78 = scmp.ne.s32.totalorder %s64, %s65
      %p79 = scmp.eq.s32.totalorder %s17, 1
      %p80 = por %p78, %p79
      %p82 = scmp.ne.s32.totalorder %s65, %s81
      %p83 = scmp.eq.s32.totalorder %s17, 0
      %p84 = por %p82, %p83
      %s85 = ssub.s32 %s18, %s30
      %p86 = scmp.eq.s32.totalorder %s85, 0
      %s88 = sadd.s32 %s87, 1
      %s89 = scalar_select %p86, %s87, %s88
      %p92 = pneg %p86
      %p93 = scmp.eq.s32.totalorder %s11, 1
      %p94 = por %p92, %p93
      %p95 = scmp.ne.s32.totalorder %s87, %s90
      %p96 = scmp.eq.s32.totalorder %s11, 0
      %p97 = por %p95, %p96
      %p98 = scmp.ne.s32.totalorder %s87, %s90
      %p99 = scmp.eq.s32.totalorder %s16, 1
      %p100 = por %p98, %p99
      %p101 = scmp.ne.s32.totalorder %s90, %s91
      %p102 = scmp.eq.s32.totalorder %s16, 0
      %p103 = por %p101, %p102
      %p104 = scmp.ne.s32.totalorder %s90, %s91
      %p105 = scmp.eq.s32.totalorder %s17, 1
      %p106 = por %p104, %p105
      %p108 = scmp.ne.s32.totalorder %s91, %s107
      %p109 = scmp.eq.s32.totalorder %s17, 0
      %p110 = por %p108, %p109
      %p111 = scmp.le.s32.totalorder 1, %s11
      %p112 = scmp.lt.s32.totalorder %s11, 3
      %p113 = pnand %p111, %p112
      %p114 = pneg %p113
      // Predicated region
      $region9: #{tpu_custom_call.1} parent=5 // pred_check
        _
      $region10: #{tpu_custom_call.1} parent=5 // pred_check_branch
        %116 = sbr.rel (%p113) target = $region12
      $region11: #{tpu_custom_call.1} parent=5 // pred_region
        %s117 = ssub.s32 %s11, 1
        // Predicated region
        $region13: #{tpu_custom_call.1} parent=11 // pred_check
          %p118 = pneg %p77
        $region14: #{tpu_custom_call.1} parent=11 // pred_check_branch
          %120 = sbr.rel (%p118) target = $region16
        $region15: #{tpu_custom_call.1} parent=11 // pred_region
          %s121 = smul.u32 8, %s21
          %p122 = scmp.lt.s32.totalorder %s121, 7
          %s123 = scalar_select %p122, %s121, 7
          %s124 = smul.addr %s123, 4
          %s125 = scalar_lea.vmem %s1, %s124
          %s126 = smul.u32 8, %s21
        $region16: #{tpu_custom_call.1} parent=11 // pred_fallthru
          _
      $region12: #{tpu_custom_call.1} parent=5 // pred_fallthru
        _
      %p127 = scmp.lt.s32.totalorder %s11, 2
      // Predicated region
      $region17: #{tpu_custom_call.1} parent=5 // pred_check
        %p128 = pneg %p127
      $region18: #{tpu_custom_call.1} parent=5 // pred_check_branch
        %130 = sbr.rel (%p128) target = $region20
      $region19: #{tpu_custom_call.1} parent=5 // pred_region
        // Predicated region
        $region21: #{tpu_custom_call.1} parent=19 // pred_check
          %p131 = pneg %p45
        $region22: #{tpu_custom_call.1} parent=19 // pred_check_branch
          %133 = sbr.rel (%p131) target = $region24
        $region23: #{tpu_custom_call.1} parent=19 // pred_region
          %s134 = smul.u32 16, %s18
          %p135 = scmp.lt.s32.totalorder %s134, 31
          %s136 = scalar_select %p135, %s134, 31
          %p137 = scmp.lt.s32.totalorder %s19, 0
          %s138 = scalar_select %p137, %s19, 0
          %s139 = sadd.s32 %s138, %s136
          %s140 = smul.addr %s139, 4
          %s141 = scalar_lea.vmem %s0, %s140
          %s142 = smul.u32 16, %s18
        $region24: #{tpu_custom_call.1} parent=19 // pred_fallthru
          _
      $region20: #{tpu_custom_call.1} parent=5 // pred_fallthru
        _
      %p143 = scmp.le.s32.totalorder 1, %s11
      %p144 = scmp.lt.s32.totalorder %s11, 3
      %p145 = pnand %p143, %p144
      %p146 = pneg %p145
      // Predicated region
      $region25: #{tpu_custom_call.1} parent=5 // pred_check
        _
      $region26: #{tpu_custom_call.1} parent=5 // pred_check_branch
        %148 = sbr.rel (%p145) target = $region28
      $region27: #{tpu_custom_call.1} parent=5 // pred_region
        %s149 = ssub.s32 %s11, 1
        %s150 = smul.u32 16, %s20
        %p151 = scmp.lt.s32.totalorder %s150, 31
        %s152 = scalar_select %p151, %s150, 31
        %p153 = scmp.lt.s32.totalorder %s21, 0
        %s154 = scalar_select %p153, %s21, 0
        %s155 = sadd.s32 %s154, %s152
        %s156 = smul.addr %s155, 4
        %s157 = scalar_lea.vmem %s0, %s156
        %p158 = pneg %p51
        %p159 = pneg %p48
        %s160 = smul.u32 8, %s21
        %p161 = scmp.lt.s32.totalorder %s160, 7
        %s162 = scalar_select %p161, %s160, 7
        %s163 = smul.addr %s162, 4
        %s164 = scalar_lea.vmem %s1, %s163
        %p165 = pneg %p77
        %p166 = pneg %p74
        %p167 = pneg %p103
        %p168 = pneg %p100
        %s169 = sand.u32 %s90, 1
        %s170 = scalar_lea.sflag [#allocation4], %s169
        %s171 = sand.u32 %s90, 1
        %s172 = smul.addr %s171, 64
        %s173 = scalar_lea.vmem [#allocation3], %s172
        %s174 = smul.u32 16, %s20
        %p175 = scmp.lt.s32.totalorder %s174, 31
        %s176 = scalar_select %p175, %s174, 31
        %p177 = scmp.lt.s32.totalorder %s21, 0
        %s178 = scalar_select %p177, %s21, 0
        %s179 = sadd.s32 %s178, %s176
        %s180 = smul.addr %s179, 4
        %s181 = scalar_lea.vmem %s0, %s180
        %s182 = smul.u32 16, %s20
        %s183 = smul.u32 8, %s21
        %p184 = scmp.lt.s32.totalorder %s183, 7
        %s185 = scalar_select %p184, %s183, 7
        %s186 = smul.addr %s185, 4
        %s187 = scalar_lea.vmem %s1, %s186
        %s188 = smul.u32 8, %s21
        %s189 = smul.u32 16, %s20
        %p191 = scmp.eq.s32.totalorder %s21, 0
        // Predicated region
        $region29: #{tpu_custom_call.1} parent=27 // pred_check
          %p192 = pneg %p191
        $region30: #{tpu_custom_call.1} parent=27 // pred_check_branch
          %194 = sbr.rel (%p192) target = $region32
        $region31: #{tpu_custom_call.1} parent=27 // pred_region
          %195 = vst [vmem:[#allocation2] sm:$0xff] 0.0
          %196 = vst [vmem:[#allocation2 + $0x8] sm:$0xff] 0.0
          %197 = vst [vmem:[#allocation2 + $0x10] sm:$0xff] 0.0
          %198 = vst [vmem:[#allocation2 + $0x18] sm:$0xff] 0.0
          %199 = vst [vmem:[#allocation2 + $0x20] sm:$0xff] 0.0
          %200 = vst [vmem:[#allocation2 + $0x28] sm:$0xff] 0.0
          %201 = vst [vmem:[#allocation2 + $0x30] sm:$0xff] 0.0
          %202 = vst [vmem:[#allocation2 + $0x38] sm:$0xff] 0.0
          %203 = vst [vmem:[#allocation2 + $0x40] sm:$0xff] 0.0
          %204 = vst [vmem:[#allocation2 + $0x48] sm:$0xff] 0.0
          %205 = vst [vmem:[#allocation2 + $0x50] sm:$0xff] 0.0
          %206 = vst [vmem:[#allocation2 + $0x58] sm:$0xff] 0.0
          %207 = vst [vmem:[#allocation2 + $0x60] sm:$0xff] 0.0
          %208 = vst [vmem:[#allocation2 + $0x68] sm:$0xff] 0.0
          %209 = vst [vmem:[#allocation2 + $0x70] sm:$0xff] 0.0
          %210 = vst [vmem:[#allocation2 + $0x78] sm:$0xff] 0.0
        $region32: #{tpu_custom_call.1} parent=27 // pred_fallthru
          _
        %v211 = vld [vmem:[#allocation2] sm:$0xff]
        %v212 = vld [vmem:[#allocation2 + $0x8] sm:$0xff]
        %v213 = vld [vmem:[#allocation2 + $0x10] sm:$0xff]
        %v214 = vld [vmem:[#allocation2 + $0x18] sm:$0xff]
        %v215 = vld [vmem:[#allocation2 + $0x20] sm:$0xff]
        %v216 = vld [vmem:[#allocation2 + $0x28] sm:$0xff]
        %v217 = vld [vmem:[#allocation2 + $0x30] sm:$0xff]
        %v218 = vld [vmem:[#allocation2 + $0x38] sm:$0xff]
        %v219 = vld [vmem:[#allocation2 + $0x40] sm:$0xff]
        %v220 = vld [vmem:[#allocation2 + $0x48] sm:$0xff]
        %v221 = vld [vmem:[#allocation2 + $0x50] sm:$0xff]
        %v222 = vld [vmem:[#allocation2 + $0x58] sm:$0xff]
        %v223 = vld [vmem:[#allocation2 + $0x60] sm:$0xff]
        %v224 = vld [vmem:[#allocation2 + $0x68] sm:$0xff]
        %v225 = vld [vmem:[#allocation2 + $0x70] sm:$0xff]
        %v226 = vld [vmem:[#allocation2 + $0x78] sm:$0xff]
        %v227 = vld [vmem:[%s181] sm:$0xf]
        %v228 = vld [vmem:[%s181 + $0x4] sm:$0xf]
        %v229 = vld [vmem:[%s181 + $0x8] sm:$0xf]
        %v230 = vld [vmem:[%s181 + $0xc] sm:$0xf]
        %v231 = vld [vmem:[%s181 + $0x10] sm:$0xf]
        %v232 = vld [vmem:[%s181 + $0x14] sm:$0xf]
        %v233 = vld [vmem:[%s181 + $0x18] sm:$0xf]
        %v234 = vld [vmem:[%s181 + $0x1c] sm:$0xf]
        %v235 = vld [vmem:[%s181 + $0x20] sm:$0xf]
        %v236 = vld [vmem:[%s181 + $0x24] sm:$0xf]
        %v237 = vld [vmem:[%s181 + $0x28] sm:$0xf]
        %v238 = vld [vmem:[%s181 + $0x2c] sm:$0xf]
        %v239 = vld [vmem:[%s181 + $0x30] sm:$0xf]
        %v240 = vld [vmem:[%s181 + $0x34] sm:$0xf]
        %v241 = vld [vmem:[%s181 + $0x38] sm:$0xf]
        %v242 = vld [vmem:[%s181 + $0x3c] sm:$0xf]
        %v243 = vld [vmem:[%s187] sm:$0xf]
        %v244 = vld [vmem:[%s187 + $0x4] sm:$0xf]
        %v245 = vld [vmem:[%s187 + $0x8] sm:$0xf]
        %v246 = vld [vmem:[%s187 + $0xc] sm:$0xf]
        %v247 = vld [vmem:[%s187 + $0x10] sm:$0xf]
        %v248 = vld [vmem:[%s187 + $0x14] sm:$0xf]
        %v249 = vld [vmem:[%s187 + $0x18] sm:$0xf]
        %v250 = vld [vmem:[%s187 + $0x1c] sm:$0xf]
        %v267 = vunpack.c.l.b16 %v227
        %v268 = vunpack.c.l.b16 %v228
        %v269 = vunpack.c.l.b16 %v229
        %v270 = vunpack.c.l.b16 %v230
        %v271 = vunpack.c.l.b16 %v231
        %v272 = vunpack.c.l.b16 %v232
        %v273 = vunpack.c.l.b16 %v233
        %v274 = vunpack.c.l.b16 %v234
        %v275 = vunpack.c.l.b16 %v235
        %v276 = vunpack.c.l.b16 %v236
        %v277 = vunpack.c.l.b16 %v237
        %v278 = vunpack.c.l.b16 %v238
        %v279 = vunpack.c.l.b16 %v239
        %v280 = vunpack.c.l.b16 %v240
        %v281 = vunpack.c.l.b16 %v241
        %v282 = vunpack.c.l.b16 %v242
        %v283 = vpack.c.b16 %v268, %v267
        %v284 = vpack.c.b16 %v270, %v269
        %v285 = vpack.c.b16 %v272, %v271
        %v286 = vpack.c.b16 %v274, %v273
        %v287 = vpack.c.b16 %v276, %v275
        %v288 = vpack.c.b16 %v278, %v277
        %v289 = vpack.c.b16 %v280, %v279
        %v290 = vpack.c.b16 %v282, %v281
        %v299 = vunpack.c.l.b16 %v243
        %v300 = vunpack.c.l.b16 %v244
        %v301 = vunpack.c.l.b16 %v245
        %v302 = vunpack.c.l.b16 %v246
        %v303 = vunpack.c.l.b16 %v247
        %v304 = vunpack.c.l.b16 %v248
        %v305 = vunpack.c.l.b16 %v249
        %v306 = vunpack.c.l.b16 %v250
        %v307 = vpack.c.b16 %v300, %v299
        %v308 = vpack.c.b16 %v302, %v301
        %v309 = vpack.c.b16 %v304, %v303
        %v310 = vpack.c.b16 %v306, %v305
        %vm315 = vcmask 523264
        %v317 = vsel %vm315, %v283, 0
        %v320 = vsel %vm315, %v284, 0
        %v323 = vsel %vm315, %v285, 0
        %v326 = vsel %vm315, %v286, 0
        %v329 = vsel %vm315, %v287, 0
        %v332 = vsel %vm315, %v288, 0
        %v335 = vsel %vm315, %v289, 0
        %v338 = vsel %vm315, %v290, 0
        %340 = vmatpush.bf16.msra.mxu0 0
        %341 = vmatpush.bf16.msra.mxu0 0
        %342 = vmatpush.bf16.msra.mxu0 0
        %343 = vmatpush.bf16.msra.mxu0 0
        %344 = vmatpush.bf16.msra.mxu0 %v310
        %345 = vmatpush.bf16.msra.mxu0 %v309
        %346 = vmatpush.bf16.msra.mxu0 %v308
        %347 = vmatpush.bf16.msra.mxu0 %v307
        %348 = vmatmul.bf16.gmra.mxu0 %v317
        %v349 = vpop.f32.mrf.mxu0
        %v350 = vadd.f32 0.0, %v349
        %v351 = vpop.f32.mrf.mxu0
        %v352 = vadd.f32 0.0, %v351
        %353 = vmatmul.bf16.gmra.mxu0 %v320
        %v354 = vpop.f32.mrf.mxu0
        %v355 = vadd.f32 0.0, %v354
        %v356 = vpop.f32.mrf.mxu0
        %v357 = vadd.f32 0.0, %v356
        %358 = vmatmul.bf16.gmra.mxu0 %v323
        %v359 = vpop.f32.mrf.mxu0
        %v360 = vadd.f32 0.0, %v359
        %v361 = vpop.f32.mrf.mxu0
        %v362 = vadd.f32 0.0, %v361
        %363 = vmatmul.bf16.gmra.mxu0 %v326
        %v364 = vpop.f32.mrf.mxu0
        %v365 = vadd.f32 0.0, %v364
        %v366 = vpop.f32.mrf.mxu0
        %v367 = vadd.f32 0.0, %v366
        %368 = vmatmul.bf16.gmra.mxu0 %v329
        %v369 = vpop.f32.mrf.mxu0
        %v370 = vadd.f32 0.0, %v369
        %v371 = vpop.f32.mrf.mxu0
        %v372 = vadd.f32 0.0, %v371
        %373 = vmatmul.bf16.gmra.mxu0 %v332
        %v374 = vpop.f32.mrf.mxu0
        %v375 = vadd.f32 0.0, %v374
        %v376 = vpop.f32.mrf.mxu0
        %v377 = vadd.f32 0.0, %v376
        %378 = vmatmul.bf16.gmra.mxu0 %v335
        %v379 = vpop.f32.mrf.mxu0
        %v380 = vadd.f32 0.0, %v379
        %v381 = vpop.f32.mrf.mxu0
        %v382 = vadd.f32 0.0, %v381
        %383 = vmatmul.bf16.gmra.mxu0 %v338
        %v384 = vpop.f32.mrf.mxu0
        %v385 = vadd.f32 0.0, %v384
        %v386 = vpop.f32.mrf.mxu0
        %v387 = vadd.f32 0.0, %v386
        %388 = vdwg.mxu0
        %v389 = vadd.f32 %v211, %v350
        %v390 = vadd.f32 %v212, %v352
        %v391 = vadd.f32 %v213, %v355
        %v392 = vadd.f32 %v214, %v357
        %v393 = vadd.f32 %v215, %v360
        %v394 = vadd.f32 %v216, %v362
        %v395 = vadd.f32 %v217, %v365
        %v396 = vadd.f32 %v218, %v367
        %v397 = vadd.f32 %v219, %v370
        %v398 = vadd.f32 %v220, %v372
        %v399 = vadd.f32 %v221, %v375
        %v400 = vadd.f32 %v222, %v377
        %v401 = vadd.f32 %v223, %v380
        %v402 = vadd.f32 %v224, %v382
        %v403 = vadd.f32 %v225, %v385
        %v404 = vadd.f32 %v226, %v387
        %405 = vst [vmem:[#allocation2] sm:$0xff] %v389
        %406 = vst [vmem:[#allocation2 + $0x8] sm:$0xff] %v390
        %407 = vst [vmem:[#allocation2 + $0x10] sm:$0xff] %v391
        %408 = vst [vmem:[#allocation2 + $0x18] sm:$0xff] %v392
        %409 = vst [vmem:[#allocation2 + $0x20] sm:$0xff] %v393
        %410 = vst [vmem:[#allocation2 + $0x28] sm:$0xff] %v394
        %411 = vst [vmem:[#allocation2 + $0x30] sm:$0xff] %v395
        %412 = vst [vmem:[#allocation2 + $0x38] sm:$0xff] %v396
        %413 = vst [vmem:[#allocation2 + $0x40] sm:$0xff] %v397
        %414 = vst [vmem:[#allocation2 + $0x48] sm:$0xff] %v398
        %415 = vst [vmem:[#allocation2 + $0x50] sm:$0xff] %v399
        %416 = vst [vmem:[#allocation2 + $0x58] sm:$0xff] %v400
        %417 = vst [vmem:[#allocation2 + $0x60] sm:$0xff] %v401
        %418 = vst [vmem:[#allocation2 + $0x68] sm:$0xff] %v402
        %419 = vst [vmem:[#allocation2 + $0x70] sm:$0xff] %v403
        %420 = vst [vmem:[#allocation2 + $0x78] sm:$0xff] %v404
        // Predicated region
        $region33: #{tpu_custom_call.1} parent=27 // pred_check
          %p421 = pneg %p191
        $region34: #{tpu_custom_call.1} parent=27 // pred_check_branch
          %423 = sbr.rel (%p421) target = $region36
        $region35: #{tpu_custom_call.1} parent=27 // pred_region
          %v424 = vld [vmem:[#allocation2] sm:$0xff]
          %v425 = vld [vmem:[#allocation2 + $0x8] sm:$0xff]
          %v426 = vld [vmem:[#allocation2 + $0x10] sm:$0xff]
          %v427 = vld [vmem:[#allocation2 + $0x18] sm:$0xff]
          %v428 = vld [vmem:[#allocation2 + $0x20] sm:$0xff]
          %v429 = vld [vmem:[#allocation2 + $0x28] sm:$0xff]
          %v430 = vld [vmem:[#allocation2 + $0x30] sm:$0xff]
          %v431 = vld [vmem:[#allocation2 + $0x38] sm:$0xff]
          %v432 = vld [vmem:[#allocation2 + $0x40] sm:$0xff]
          %v433 = vld [vmem:[#allocation2 + $0x48] sm:$0xff]
          %v434 = vld [vmem:[#allocation2 + $0x50] sm:$0xff]
          %v435 = vld [vmem:[#allocation2 + $0x58] sm:$0xff]
          %v436 = vld [vmem:[#allocation2 + $0x60] sm:$0xff]
          %v437 = vld [vmem:[#allocation2 + $0x68] sm:$0xff]
          %v438 = vld [vmem:[#allocation2 + $0x70] sm:$0xff]
          %v439 = vld [vmem:[#allocation2 + $0x78] sm:$0xff]
          %v440 = vpack.c.bf16 %v424, %v424
          %v441 = vpack.c.bf16 %v425, %v425
          %v442 = vpack.c.bf16 %v426, %v426
          %v443 = vpack.c.bf16 %v427, %v427
          %v444 = vpack.c.bf16 %v428, %v428
          %v445 = vpack.c.bf16 %v429, %v429
          %v446 = vpack.c.bf16 %v430, %v430
          %v447 = vpack.c.bf16 %v431, %v431
          %v448 = vpack.c.bf16 %v432, %v432
          %v449 = vpack.c.bf16 %v433, %v433
          %v450 = vpack.c.bf16 %v434, %v434
          %v451 = vpack.c.bf16 %v435, %v435
          %v452 = vpack.c.bf16 %v436, %v436
          %v453 = vpack.c.bf16 %v437, %v437
          %v454 = vpack.c.bf16 %v438, %v438
          %v455 = vpack.c.bf16 %v439, %v439
          %456 = vst [vmem:[%s173] sm:$0xf] %v440
          %457 = vst [vmem:[%s173 + $0x4] sm:$0xf] %v441
          %458 = vst [vmem:[%s173 + $0x8] sm:$0xf] %v442
          %459 = vst [vmem:[%s173 + $0xc] sm:$0xf] %v443
          %460 = vst [vmem:[%s173 + $0x10] sm:$0xf] %v444
          %461 = vst [vmem:[%s173 + $0x14] sm:$0xf] %v445
          %462 = vst [vmem:[%s173 + $0x18] sm:$0xf] %v446
          %463 = vst [vmem:[%s173 + $0x1c] sm:$0xf] %v447
          %464 = vst [vmem:[%s173 + $0x20] sm:$0xf] %v448
          %465 = vst [vmem:[%s173 + $0x24] sm:$0xf] %v449
          %466 = vst [vmem:[%s173 + $0x28] sm:$0xf] %v450
          %467 = vst [vmem:[%s173 + $0x2c] sm:$0xf] %v451
          %468 = vst [vmem:[%s173 + $0x30] sm:$0xf] %v452
          %469 = vst [vmem:[%s173 + $0x34] sm:$0xf] %v453
          %470 = vst [vmem:[%s173 + $0x38] sm:$0xf] %v454
          %471 = vst [vmem:[%s173 + $0x3c] sm:$0xf] %v455
        $region36: #{tpu_custom_call.1} parent=27 // pred_fallthru
          _
        %s472 = sand.u32 %s90, 1
        %s473 = scalar_lea.sflag [#allocation4], %s472
        %s474 = sand.u32 %s90, 1
        %s475 = smul.addr %s474, 64
        %s476 = scalar_lea.vmem [#allocation3], %s475
        // Predicated region
        $region37: #{tpu_custom_call.1} parent=27 // pred_check
          %p477 = pneg %p100
        $region38: #{tpu_custom_call.1} parent=27 // pred_check_branch
          %479 = sbr.rel (%p477) target = $region40
        $region39: #{tpu_custom_call.1} parent=27 // pred_region
          %s480 = smul.u32 16, %s20
          %482 = vsyncadd %s473, 0
          %s483 = smul.addr %s480, 4
          %s484 = scalar_lea.hbm %s2, %s483
          %s485 = sshll.u32 %s476, 4
          %s486 = int_to_ptr.vmem [resolvable:$true] %s485
          %s487 = sshll.u32 %s484, 4
          %s488 = int_to_ptr.hbm [resolvable:$true] %s487
          %493 = dma.vmem_to_hbm [thread:$0]  %s486, 1024, %s488, %s473, 64, 64, 4
        $region40: #{tpu_custom_call.1} parent=27 // pred_fallthru
          _
      $region28: #{tpu_custom_call.1} parent=5 // pred_fallthru
        _
      %p494 = scmp.le.s32.totalorder 2, %s11
      // Predicated region
      $region41: #{tpu_custom_call.1} parent=5 // pred_check
        %p495 = pneg %p494
      $region42: #{tpu_custom_call.1} parent=5 // pred_check_branch
        %497 = sbr.rel (%p495) target = $region44
      $region43: #{tpu_custom_call.1} parent=5 // pred_region
        %s498 = ssub.s32 %s11, 2
        // Predicated region
        $region45: #{tpu_custom_call.1} parent=43 // pred_check
          %p499 = pneg %p106
        $region46: #{tpu_custom_call.1} parent=43 // pred_check_branch
          %501 = sbr.rel (%p499) target = $region48
        $region47: #{tpu_custom_call.1} parent=43 // pred_region
          %s502 = sand.u32 %s91, 1
          %s503 = scalar_lea.sflag [#allocation4], %s502
          %s504 = sand.u32 %s91, 1
          %s505 = smul.addr %s504, 64
          %s506 = scalar_lea.vmem [#allocation3], %s505
          %508 = dma.done %s503, 1024
        $region48: #{tpu_custom_call.1} parent=43 // pred_fallthru
          _
      $region44: #{tpu_custom_call.1} parent=5 // pred_fallthru
        _
    $region6: #{tpu_custom_call.1} parent=1 // loop_footer
      %s15 = sadd.s32 1, %s11
    $region7: #{tpu_custom_call.1} parent=1 // loop_footer_branch
      %10 = sbr.rel target = $region3
    $region8: #{tpu_custom_call.1} parent=1 // loop_exit
      _
    %509 = vsyncpa [#allocation4], 1
    %s510 = scalar_lea.sflag [#allocation4], 1
    %511 = vsyncpa %s510, 1

</llo_original>
